<compile_context>
chip_gen: v7x
topology: tpu7x:2x2x1
jax: 0.10.0
libtpu: 0.0.40
codegen_flags: <defaults>
</compile_context>

<pallas_src>
import jax
import jax.numpy as jnp
from jax.experimental import pallas as pl
from jax.experimental.pallas import tpu as pltpu

HIDDEN = 64      # torch hidden width
HID_PAD = 128    # lane-padded hidden width
LANE = 128
SUBLANE = 8


def _round_up(x, m):
    return ((x + m - 1) // m) * m


def qnet_kernel(x_ref, w1_ref, w2_ref, w3_ref, b_ref, out_ref):
    """Fused 3-layer MLP: out = relu(relu(x@W1+b1)@W2+b2)@W3+b3.

    Weights may be bf16 (MXU inputs only); bias-add / ReLU stay in f32 (VPU).
    Biases are packed into one (8, L) f32 buffer: rows 0/1/2 hold b1/b2/b3.
    """
    dot_dt = w1_ref.dtype
    x = x_ref[...].astype(dot_dt)
    h1 = jnp.dot(x, w1_ref[...], preferred_element_type=jnp.float32)
    h1 = jnp.maximum(h1 + b_ref[0:1, : w1_ref.shape[1]], 0.0)
    h2 = jnp.dot(h1.astype(dot_dt), w2_ref[...], preferred_element_type=jnp.float32)
    h2 = jnp.maximum(h2 + b_ref[1:2, : w2_ref.shape[1]], 0.0)
    out = jnp.dot(h2.astype(dot_dt), w3_ref[...], preferred_element_type=jnp.float32)
    out_ref[...] = out + b_ref[2:3, : w3_ref.shape[1]]


def init_params(key, state_space_size, action_space_size, hidden=HIDDEN):
    """Deterministic init mimicking torch.nn.Linear default (U(-1/sqrt(fan_in), +))."""
    def linear(k, fan_in, fan_out):
        kw, kb = jax.random.split(k)
        bound = 1.0 / jnp.sqrt(fan_in)
        # Stored as (in, out) so the kernel does x @ W (transpose of torch layout).
        w = jax.random.uniform(kw, (fan_in, fan_out), jnp.float32, -bound, bound)
        b = jax.random.uniform(kb, (1, fan_out), jnp.float32, -bound, bound)
        return w, b

    k1, k2, k3 = jax.random.split(key, 3)
    w1, b1 = linear(k1, state_space_size, hidden)
    w2, b2 = linear(k2, hidden, hidden)
    w3, b3 = linear(k3, hidden, action_space_size)
    return (w1, b1, w2, b2, w3, b3)


def pack_params(params, matmul_dtype=jnp.float32):
    """Zero-pad hidden/output dims to 128 lanes and pack biases into one buffer.

    Done once at parameter-prep time, not per forward call.
    """
    w1, b1, w2, b2, w3, b3 = params
    F = w1.shape[0]
    A = w3.shape[1]
    n_pad = max(LANE, _round_up(A, LANE))
    lmax = max(HID_PAD, n_pad)

    w1p = jnp.zeros((F, HID_PAD), jnp.float32).at[:, :HIDDEN].set(w1)
    w2p = jnp.zeros((HID_PAD, HID_PAD), jnp.float32).at[:HIDDEN, :HIDDEN].set(w2)
    w3p = jnp.zeros((HID_PAD, n_pad), jnp.float32).at[:HIDDEN, :A].set(w3)

    bpack = jnp.zeros((SUBLANE, lmax), jnp.float32)
    bpack = bpack.at[0, :HIDDEN].set(b1.reshape(-1))
    bpack = bpack.at[1, :HIDDEN].set(b2.reshape(-1))
    bpack = bpack.at[2, :A].set(b3.reshape(-1))

    return (w1p.astype(matmul_dtype), w2p.astype(matmul_dtype),
            w3p.astype(matmul_dtype), bpack, A, n_pad)


def qnetwork_forward(state, packed):
    """state: (B, H, W) float32. Returns (B, action_space_size) float32."""
    w1p, w2p, w3p, bpack, A, n_pad = packed
    B = state.shape[0]
    F = state.shape[1] * state.shape[2]
    x = state.reshape(B, F)  # torch .view(-1, H*W)

    # Batch tile: 256 rows when the batch is large (fills the MXU M dim and
    # amortizes grid-step overhead); otherwise pad the whole batch to 8 rows.
    TB = 256 if B >= 256 else max(SUBLANE, _round_up(B, SUBLANE))
    B_pad = _round_up(B, TB)
    if B_pad != B:
        x = jnp.pad(x, ((0, B_pad - B), (0, 0)))

    hid = w1p.shape[1]
    lmax = bpack.shape[1]
    grid = (B_pad // TB,)

    flops = 2 * B_pad * (F * hid + hid * hid + hid * n_pad)
    bytes_accessed = (x.size * x.dtype.itemsize
                      + w1p.size * w1p.dtype.itemsize
                      + w2p.size * w2p.dtype.itemsize
                      + w3p.size * w3p.dtype.itemsize
                      + bpack.size * 4
                      + B_pad * n_pad * 4)

    out = pl.pallas_call(
        qnet_kernel,
        out_shape=jax.ShapeDtypeStruct((B_pad, n_pad), jnp.float32),
        grid_spec=pltpu.PrefetchScalarGridSpec(
            num_scalar_prefetch=0,
            grid=grid,
            in_specs=[
                pl.BlockSpec((TB, F), lambda i: (i, 0)),        # x: tiled over batch
                pl.BlockSpec((F, hid), lambda i: (0, 0)),       # w1: VMEM-resident
                pl.BlockSpec((hid, hid), lambda i: (0, 0)),     # w2
                pl.BlockSpec((hid, n_pad), lambda i: (0, 0)),   # w3
                pl.BlockSpec((SUBLANE, lmax), lambda i: (0, 0)),  # packed biases
            ],
            out_specs=pl.BlockSpec((TB, n_pad), lambda i: (i, 0)),
        ),
        compiler_params=pltpu.CompilerParams(
            dimension_semantics=("parallel",)),
        cost_estimate=pl.CostEstimate(
            flops=flops, transcendentals=0, bytes_accessed=bytes_accessed),
    )(x, w1p, w2p, w3p, bpack)

    return out[:B, :A]


if __name__ == "__main__":
    key = jax.random.PRNGKey(0)
    k_state, k_params = jax.random.split(key)

    # Small shapes implied by forward: state is (B, H, W), state_space_size = H*W.
    B, H, W = 2, 4, 8
    state_space_size = H * W          # 32
    action_space_size = 4

    state = jax.random.normal(k_state, (B, H, W), jnp.float32)
    params = init_params(k_params, state_space_size, action_space_size)

    # Pure-JAX reference of the same math (f32).
    xr = state.reshape(B, -1)
    w1, b1, w2, b2, w3, b3 = params
    ref = jnp.maximum(xr @ w1 + b1, 0.0)
    ref = jnp.maximum(ref @ w2 + b2, 0.0)
    ref = ref @ w3 + b3

    # f32 MXU-input path (v5e-friendly; exact vs reference).
    q = qnetwork_forward(state, pack_params(params, jnp.float32))
    jax.block_until_ready(q)
    assert q.shape == (B, action_space_size)
    assert jnp.allclose(q, ref, atol=1e-5, rtol=1e-5)

    # bf16 MXU-input path (v6e/v7x throughput); f32 accumulation + f32 bias/ReLU,
    # so only the matmul inputs are rounded — looser tolerance vs f32 reference.
    q_bf16 = qnetwork_forward(state, pack_params(params, jnp.bfloat16))
    jax.block_until_ready(q_bf16)
    assert q_bf16.shape == (B, action_space_size)
    assert jnp.allclose(q_bf16, ref, atol=5e-2, rtol=5e-2)

    print("KERNEL_OK")
</pallas_src>

<mosaic_0001>
module attributes {stable_mosaic.version = 11 : i64} {
  func.func @qnet_kernel(%arg0: i32, %arg1: memref<8x32xf32, #tpu.memory_space<vmem>>, %arg2: memref<32x128xf32, #tpu.memory_space<vmem>>, %arg3: memref<128x128xf32, #tpu.memory_space<vmem>>, %arg4: memref<128x128xf32, #tpu.memory_space<vmem>>, %arg5: memref<8x128xf32, #tpu.memory_space<vmem>>, %arg6: memref<8x128xf32, #tpu.memory_space<vmem>>) attributes {dimension_semantics = [#tpu.dimension_semantics<parallel>], iteration_bounds = array<i64: 1>, scalar_prefetch = 0 : i64, scratch_operands = 0 : i64, tpu.core_type = #tpu.core_type<tc>, window_params = [{transform_indices = @transform_0, window_bounds = array<i64: 8, 32>}, {pipeline_mode = #tpu.pipeline_mode<synchronous>, transform_indices = @transform_1, window_bounds = array<i64: 32, 128>}, {pipeline_mode = #tpu.pipeline_mode<synchronous>, transform_indices = @transform_2, window_bounds = array<i64: 128, 128>}, {pipeline_mode = #tpu.pipeline_mode<synchronous>, transform_indices = @transform_3, window_bounds = array<i64: 128, 128>}, {pipeline_mode = #tpu.pipeline_mode<synchronous>, transform_indices = @transform_4, window_bounds = array<i64: 8, 128>}, {transform_indices = @transform_5, window_bounds = array<i64: 8, 128>}]} {
    %c0 = arith.constant 0 : index
    %c0_0 = arith.constant 0 : index
    %0 = vector.load %arg1[%c0, %c0_0] : memref<8x32xf32, #tpu.memory_space<vmem>>, vector<8x32xf32>
    %c0_1 = arith.constant 0 : index
    %c0_2 = arith.constant 0 : index
    %1 = vector.load %arg2[%c0_1, %c0_2] : memref<32x128xf32, #tpu.memory_space<vmem>>, vector<32x128xf32>
    %cst = arith.constant dense<0.000000e+00> : vector<8x128xf32>
    %2 = tpu.matmul %0, %1, %cst {dimension_numbers = #tpu.dot_dimension_numbers<[1], [0], [0], [1], [0, 0, 1, 1], [], []>} : vector<8x32xf32>, vector<32x128xf32>, vector<8x128xf32> -> vector<8x128xf32>
    %c0_3 = arith.constant 0 : index
    %c0_4 = arith.constant 0 : index
    %3 = vector.load %arg5[%c0_3, %c0_4] : memref<8x128xf32, #tpu.memory_space<vmem>>, vector<1x128xf32>
    %4 = vector.broadcast %3 : vector<1x128xf32> to vector<8x128xf32>
    %5 = arith.addf %2, %4 : vector<8x128xf32>
    %cst_5 = arith.constant 0.000000e+00 : f32
    %6 = vector.broadcast %cst_5 : f32 to vector<8x128xf32>
    %7 = arith.maximumf %5, %6 : vector<8x128xf32>
    %c0_6 = arith.constant 0 : index
    %c0_7 = arith.constant 0 : index
    %8 = vector.load %arg3[%c0_6, %c0_7] : memref<128x128xf32, #tpu.memory_space<vmem>>, vector<128x128xf32>
    %cst_8 = arith.constant dense<0.000000e+00> : vector<8x128xf32>
    %9 = tpu.matmul %7, %8, %cst_8 {dimension_numbers = #tpu.dot_dimension_numbers<[1], [0], [0], [1], [0, 0, 1, 1], [], []>} : vector<8x128xf32>, vector<128x128xf32>, vector<8x128xf32> -> vector<8x128xf32>
    %c1 = arith.constant 1 : index
    %c0_9 = arith.constant 0 : index
    %10 = vector.load %arg5[%c1, %c0_9] : memref<8x128xf32, #tpu.memory_space<vmem>>, vector<1x128xf32>
    %11 = vector.broadcast %10 : vector<1x128xf32> to vector<8x128xf32>
    %12 = arith.addf %9, %11 : vector<8x128xf32>
    %cst_10 = arith.constant 0.000000e+00 : f32
    %13 = vector.broadcast %cst_10 : f32 to vector<8x128xf32>
    %14 = arith.maximumf %12, %13 : vector<8x128xf32>
    %c0_11 = arith.constant 0 : index
    %c0_12 = arith.constant 0 : index
    %15 = vector.load %arg4[%c0_11, %c0_12] : memref<128x128xf32, #tpu.memory_space<vmem>>, vector<128x128xf32>
    %cst_13 = arith.constant dense<0.000000e+00> : vector<8x128xf32>
    %16 = tpu.matmul %14, %15, %cst_13 {dimension_numbers = #tpu.dot_dimension_numbers<[1], [0], [0], [1], [0, 0, 1, 1], [], []>} : vector<8x128xf32>, vector<128x128xf32>, vector<8x128xf32> -> vector<8x128xf32>
    %c2 = arith.constant 2 : index
    %c0_14 = arith.constant 0 : index
    %17 = vector.load %arg5[%c2, %c0_14] : memref<8x128xf32, #tpu.memory_space<vmem>>, vector<1x128xf32>
    %18 = vector.broadcast %17 : vector<1x128xf32> to vector<8x128xf32>
    %19 = arith.addf %16, %18 : vector<8x128xf32>
    %c0_15 = arith.constant 0 : index
    %c0_16 = arith.constant 0 : index
    %20 = vector.load %arg6[%c0_15, %c0_16] : memref<8x128xf32, #tpu.memory_space<vmem>>, vector<8x128xf32>
    tpu.vector_store %arg6[%c0_15, %c0_16], %19 {strides = array<i32>} : memref<8x128xf32, #tpu.memory_space<vmem>>, vector<8x128xf32>,
    return
  }
  func.func @transform_0(%arg0: i32) -> (i32, i32) {
    %c0_i32 = arith.constant 0 : i32
    %c0_i32_0 = arith.constant 0 : i32
    return %arg0, %c0_i32 : i32, i32
  }
  func.func @transform_1(%arg0: i32) -> (i32, i32) {
    %c0_i32 = arith.constant 0 : i32
    %c0_i32_0 = arith.constant 0 : i32
    %c0_i32_1 = arith.constant 0 : i32
    return %c0_i32, %c0_i32_0 : i32, i32
  }
  func.func @transform_2(%arg0: i32) -> (i32, i32) {
    %c0_i32 = arith.constant 0 : i32
    %c0_i32_0 = arith.constant 0 : i32
    %c0_i32_1 = arith.constant 0 : i32
    return %c0_i32, %c0_i32_0 : i32, i32
  }
  func.func @transform_3(%arg0: i32) -> (i32, i32) {
    %c0_i32 = arith.constant 0 : i32
    %c0_i32_0 = arith.constant 0 : i32
    %c0_i32_1 = arith.constant 0 : i32
    return %c0_i32, %c0_i32_0 : i32, i32
  }
  func.func @transform_4(%arg0: i32) -> (i32, i32) {
    %c0_i32 = arith.constant 0 : i32
    %c0_i32_0 = arith.constant 0 : i32
    %c0_i32_1 = arith.constant 0 : i32
    return %c0_i32, %c0_i32_0 : i32, i32
  }
  func.func @transform_5(%arg0: i32) -> (i32, i32) {
    %c0_i32 = arith.constant 0 : i32
    %c0_i32_0 = arith.constant 0 : i32
    return %arg0, %c0_i32 : i32, i32
  }
}

</mosaic_0001>

<llo_original>
// kernel: tpu_custom_call.1
$region0: #{tpu_custom_call.1}
  #allocation0 [shape = 'u32[]', space=smem, size = 0x4, offset = 0x4, fixed_abs, tag = 'smem constant byte address 0x4 - core index']
  #allocation1 [shape = 'u32[144,128]{1,0:T(1,128)}', space=vmem, size = 0x12000, scoped, tag = 'internal scratch']
  %s0 = inlined_call_operand.hbm [shape: f32[8,32], index: 0, kind: input, shape index: {}]
  %s1 = inlined_call_operand.hbm [shape: f32[32,128], index: 1, kind: input, shape index: {}]
  %s2 = inlined_call_operand.hbm [shape: f32[128,128], index: 2, kind: input, shape index: {}]
  %s3 = inlined_call_operand.hbm [shape: f32[128,128], index: 3, kind: input, shape index: {}]
  %s4 = inlined_call_operand.vmem [shape: f32[8,128], index: 4, kind: input, shape index: {}]
  %s5 = inlined_call_operand.hbm [shape: f32[8,128], index: 5, kind: output, shape index: {}]
  %s6 = sld [smem:[#allocation0]]
  $region46: #{tpu_custom_call.1} parent=0
    _
  %s8 = ssub.s32 1, %s6
  %s9 = scalar_select 0, %s8, %s6
  $region1: #{tpu_custom_call.1} parent=0
    #allocation2 [shape = 'u8[4096]{0}', space=vmem, size = 0x1000, scoped, tag = 'input window, operand 0, single buffered']
    #allocation3 [shape = 's32[1]{0}', space=sflag, size = 0x4, scoped, tag = 'scoped memory for tpu_custom_call.1']
    #allocation4 [shape = 's32[1]{0}', space=sflag, size = 0x4, scoped, tag = 'scoped memory for tpu_custom_call.1']
    #allocation5 [shape = 'u8[16384]{0}', space=vmem, size = 0x4000, scoped, tag = 'input window, operand 1, single buffered']
    #allocation6 [shape = 's32[1]{0}', space=sflag, size = 0x4, scoped, tag = 'scoped memory for tpu_custom_call.1']
    #allocation7 [shape = 'u8[65536]{0}', space=vmem, size = 0x10000, scoped, tag = 'input window, operand 2, single buffered']
    #allocation8 [shape = 'u8[65536]{0}', space=vmem, size = 0x10000, scoped, tag = 'input window, operand 3, single buffered']
    #allocation9 [shape = 's32[1]{0}', space=sflag, size = 0x4, scoped, tag = 'scoped memory for tpu_custom_call.1']
    #allocation10 [shape = 'u8[4096]{0}', space=vmem, size = 0x1000, scoped, tag = 'output window, operand 0, single buffered']
    %10 = vsyncpa [#allocation3], 0
    %11 = vsyncpa [#allocation6], 0
    %12 = vsyncpa [#allocation9], 0
    %13 = vsyncpa [#allocation4], 0
    // Predicated region
    $region2: #{tpu_custom_call.1} parent=1 // pred_check
      _
    $region3: #{tpu_custom_call.1} parent=1 // pred_check_branch
      %15 = sbr.rel (0) target = $region5
    $region4: #{tpu_custom_call.1} parent=1 // pred_region
      %s17 = ssub.s32 128, 128
      %18 = vsyncadd [#allocation3], %s17
      %s20 = sshll.u32 [#allocation2], 4
      %s21 = int_to_ptr.vmem [resolvable:$true] %s20
      %23 = dma.hbm_to_vmem [thread:$0]  %s0, 128, %s21, [#allocation3]
    $region5: #{tpu_custom_call.1} parent=1 // pred_fallthru
      _
    // Predicated region
    $region6: #{tpu_custom_call.1} parent=1 // pred_check
      _
    $region7: #{tpu_custom_call.1} parent=1 // pred_check_branch
      %25 = sbr.rel (0) target = $region9
    $region8: #{tpu_custom_call.1} parent=1 // pred_region
      %s27 = ssub.s32 512, 512
      %28 = vsyncadd [#allocation6], %s27
      %s29 = sshll.u32 [#allocation5], 4
      %s30 = int_to_ptr.vmem [resolvable:$true] %s29
      %35 = dma.hbm_to_vmem [thread:$0]  %s1, 512, %s30, [#allocation6], 128, 128, 8
    $region9: #{tpu_custom_call.1} parent=1 // pred_fallthru
      _
    // Predicated region
    $region10: #{tpu_custom_call.1} parent=1 // pred_check
      _
    $region11: #{tpu_custom_call.1} parent=1 // pred_check_branch
      %37 = sbr.rel (0) target = $region13
    $region12: #{tpu_custom_call.1} parent=1 // pred_region
      %s39 = ssub.s32 2048, 2048
      %40 = vsyncadd [#allocation6], %s39
      %s41 = sshll.u32 [#allocation7], 4
      %s42 = int_to_ptr.vmem [resolvable:$true] %s41
      %47 = dma.hbm_to_vmem [thread:$0]  %s2, 2048, %s42, [#allocation6], 128, 128, 8
    $region13: #{tpu_custom_call.1} parent=1 // pred_fallthru
      _
    // Predicated region
    $region14: #{tpu_custom_call.1} parent=1 // pred_check
      _
    $region15: #{tpu_custom_call.1} parent=1 // pred_check_branch
      %49 = sbr.rel (0) target = $region17
    $region16: #{tpu_custom_call.1} parent=1 // pred_region
      %s51 = ssub.s32 2048, 2048
      %52 = vsyncadd [#allocation9], %s51
      %s53 = sshll.u32 [#allocation8], 4
      %s54 = int_to_ptr.vmem [resolvable:$true] %s53
      %59 = dma.hbm_to_vmem [thread:$0]  %s3, 2048, %s54, [#allocation9], 128, 128, 8
    $region17: #{tpu_custom_call.1} parent=1 // pred_fallthru
      _
    // Predicated region
    $region18: #{tpu_custom_call.1} parent=1 // pred_check
      _
    $region19: #{tpu_custom_call.1} parent=1 // pred_check_branch
      %61 = sbr.rel (0) target = $region21
    $region20: #{tpu_custom_call.1} parent=1 // pred_region
      _
    $region21: #{tpu_custom_call.1} parent=1 // pred_fallthru
      _
    // Predicated region
    $region22: #{tpu_custom_call.1} parent=1 // pred_check
      _
    $region23: #{tpu_custom_call.1} parent=1 // pred_check_branch
      %63 = sbr.rel (0) target = $region25
    $region24: #{tpu_custom_call.1} parent=1 // pred_region
      %64 = dma.done [#allocation3], 128
    $region25: #{tpu_custom_call.1} parent=1 // pred_fallthru
      _
    // Predicated region
    $region26: #{tpu_custom_call.1} parent=1 // pred_check
      _
    $region27: #{tpu_custom_call.1} parent=1 // pred_check_branch
      %66 = sbr.rel (0) target = $region29
    $region28: #{tpu_custom_call.1} parent=1 // pred_region
      %67 = dma.done [#allocation6], 512
    $region29: #{tpu_custom_call.1} parent=1 // pred_fallthru
      _
    // Predicated region
    $region30: #{tpu_custom_call.1} parent=1 // pred_check
      _
    $region31: #{tpu_custom_call.1} parent=1 // pred_check_branch
      %69 = sbr.rel (0) target = $region33
    $region32: #{tpu_custom_call.1} parent=1 // pred_region
      %70 = dma.done [#allocation6], 2048
    $region33: #{tpu_custom_call.1} parent=1 // pred_fallthru
      _
    // Predicated region
    $region34: #{tpu_custom_call.1} parent=1 // pred_check
      _
    $region35: #{tpu_custom_call.1} parent=1 // pred_check_branch
      %72 = sbr.rel (0) target = $region37
    $region36: #{tpu_custom_call.1} parent=1 // pred_region
      %73 = dma.done [#allocation9], 2048
    $region37: #{tpu_custom_call.1} parent=1 // pred_fallthru
      _
    %v74 = vld [vmem:[#allocation2] sm:$0xff]
    %v75 = vld [vmem:[#allocation5] sm:$0xff]
    %v76 = vld [vmem:[#allocation5 + $0x8] sm:$0xff]
    %v77 = vld [vmem:[#allocation5 + $0x10] sm:$0xff]
    %v78 = vld [vmem:[#allocation5 + $0x18] sm:$0xff]
    %v79 = vld [vmem:[%s4] sm:$0x1]
    %v80 = vlaneseq
    %v81 = vshrl.u32 %v80, 7
    %v82 = vsub.s32 0, %v81
    %v83 = vrot.slane %v79, %v82
    %vm84 = vcmask 261120
    %v86 = vsel %vm84, %v74, 0
    %88 = vmatprep.subr.mxu0 0.0
    %89 = vmatpush1.msra.mxu0 %v75
    %90 = vmatprep.subr.mxu0 0.0
    %91 = vmatpush1.msra.mxu0 %v76
    %92 = vmatprep.subr.mxu0 0.0
    %93 = vmatpush1.msra.mxu0 %v77
    %94 = vmatprep.subr.mxu0 0.0
    %95 = vmatpush1.msra.mxu0 %v78
    %96 = vmatprep.subr.mxu0 0.0
    %97 = vmatpush1.msra.mxu0 0.0
    %98 = vmatprep.subr.mxu0 0.0
    %99 = vmatpush1.msra.mxu0 0.0
    %100 = vmatprep.subr.mxu0 0.0
    %101 = vmatpush1.msra.mxu0 0.0
    %102 = vmatprep.subr.mxu0 0.0
    %103 = vmatpush1.msra.mxu0 0.0
    %104 = vmatprep.subr.mxu0 0.0
    %105 = vmatpush1.msra.mxu0 0.0
    %106 = vmatprep.subr.mxu0 0.0
    %107 = vmatpush1.msra.mxu0 0.0
    %108 = vmatprep.subr.mxu0 0.0
    %109 = vmatpush1.msra.mxu0 0.0
    %110 = vmatprep.subr.mxu0 0.0
    %111 = vmatpush1.msra.mxu0 0.0
    %112 = vmatprep.subr.mxu0 0.0
    %113 = vmatpush1.msra.mxu0 0.0
    %114 = vmatprep.subr.mxu0 0.0
    %115 = vmatpush1.msra.mxu0 0.0
    %116 = vmatprep.subr.mxu0 0.0
    %117 = vmatpush1.msra.mxu0 0.0
    %118 = vmatprep.subr.mxu0 0.0
    %119 = vmatpush1.msra.mxu0 0.0
    %120 = vmatprep.subr.mxu0 0.0
    %121 = vmatpush1.msra.mxu0 0.0
    %122 = vmatprep.subr.mxu0 0.0
    %123 = vmatpush1.msra.mxu0 0.0
    %124 = vmatprep.subr.mxu0 0.0
    %125 = vmatpush1.msra.mxu0 0.0
    %126 = vmatprep.subr.mxu0 0.0
    %127 = vmatpush1.msra.mxu0 0.0
    %128 = vmatprep.subr.mxu0 0.0
    %129 = vmatpush1.msra.mxu0 0.0
    %130 = vmatprep.subr.mxu0 0.0
    %131 = vmatpush1.msra.mxu0 0.0
    %132 = vmatprep.subr.mxu0 0.0
    %133 = vmatpush1.msra.mxu0 0.0
    %134 = vmatprep.subr.mxu0 0.0
    %135 = vmatpush1.msra.mxu0 0.0
    %136 = vmatprep.subr.mxu0 0.0
    %137 = vmatpush1.msra.mxu0 0.0
    %138 = vmatprep.subr.mxu0 0.0
    %139 = vmatpush1.msra.mxu0 0.0
    %140 = vmatprep.subr.mxu0 0.0
    %141 = vmatpush1.msra.mxu0 0.0
    %142 = vmatprep.subr.mxu0 0.0
    %143 = vmatpush1.msra.mxu0 0.0
    %144 = vmatprep.subr.mxu0 0.0
    %145 = vmatpush1.msra.mxu0 0.0
    %146 = vmatprep.subr.mxu0 0.0
    %147 = vmatpush1.msra.mxu0 0.0
    %148 = vmatprep.subr.mxu0 0.0
    %149 = vmatpush1.msra.mxu0 0.0
    %150 = vmatprep.subr.mxu0 0.0
    %151 = vmatpush1.msra.mxu0 0.0
    %152 = vmatprep.mubr.f32.mxu0 0.0
    %153 = vmatmul.mubr.f32.gmra.mrb[0].mxu0 %v86
    %v154 = vpop.f32.mrb[0].mxu0
    %v155 = vadd.f32 %v83, %v154
    %v156 = vpop.f32.mrb[0].mxu0
    %157 = vdwg.mxu0
    %v158 = vmax.f32 %v155, 0.0
    %v159 = vld [vmem:[#allocation7] sm:$0xff]
    %v160 = vld [vmem:[#allocation7 + $0x8] sm:$0xff]
    %v161 = vld [vmem:[#allocation7 + $0x10] sm:$0xff]
    %v162 = vld [vmem:[#allocation7 + $0x18] sm:$0xff]
    %v163 = vld [vmem:[#allocation7 + $0x20] sm:$0xff]
    %v164 = vld [vmem:[#allocation7 + $0x28] sm:$0xff]
    %v165 = vld [vmem:[#allocation7 + $0x30] sm:$0xff]
    %v166 = vld [vmem:[#allocation7 + $0x38] sm:$0xff]
    %v167 = vld [vmem:[#allocation7 + $0x40] sm:$0xff]
    %v168 = vld [vmem:[#allocation7 + $0x48] sm:$0xff]
    %v169 = vld [vmem:[#allocation7 + $0x50] sm:$0xff]
    %v170 = vld [vmem:[#allocation7 + $0x58] sm:$0xff]
    %v171 = vld [vmem:[#allocation7 + $0x60] sm:$0xff]
    %v172 = vld [vmem:[#allocation7 + $0x68] sm:$0xff]
    %v173 = vld [vmem:[#allocation7 + $0x70] sm:$0xff]
    %v174 = vld [vmem:[#allocation7 + $0x78] sm:$0xff]
    %v175 = vld [vmem:[%s4 + $0x1] sm:$0x1]
    %v176 = vlaneseq
    %v177 = vshrl.u32 %v176, 7
    %v178 = vsub.s32 0, %v177
    %v179 = vrot.slane %v175, %v178
    %180 = vmatprep.subr.mxu0 0.0
    %181 = vmatpush1.msra.mxu0 %v159
    %182 = vmatprep.subr.mxu0 0.0
    %183 = vmatpush1.msra.mxu0 %v160
    %184 = vmatprep.subr.mxu0 0.0
    %185 = vmatpush1.msra.mxu0 %v161
    %186 = vmatprep.subr.mxu0 0.0
    %187 = vmatpush1.msra.mxu0 %v162
    %188 = vmatprep.subr.mxu0 0.0
    %189 = vmatpush1.msra.mxu0 %v163
    %190 = vmatprep.subr.mxu0 0.0
    %191 = vmatpush1.msra.mxu0 %v164
    %192 = vmatprep.subr.mxu0 0.0
    %193 = vmatpush1.msra.mxu0 %v165
    %194 = vmatprep.subr.mxu0 0.0
    %195 = vmatpush1.msra.mxu0 %v166
    %196 = vmatprep.subr.mxu0 0.0
    %197 = vmatpush1.msra.mxu0 %v167
    %198 = vmatprep.subr.mxu0 0.0
    %199 = vmatpush1.msra.mxu0 %v168
    %200 = vmatprep.subr.mxu0 0.0
    %201 = vmatpush1.msra.mxu0 %v169
    %202 = vmatprep.subr.mxu0 0.0
    %203 = vmatpush1.msra.mxu0 %v170
    %204 = vmatprep.subr.mxu0 0.0
    %205 = vmatpush1.msra.mxu0 %v171
    %206 = vmatprep.subr.mxu0 0.0
    %207 = vmatpush1.msra.mxu0 %v172
    %208 = vmatprep.subr.mxu0 0.0
    %209 = vmatpush1.msra.mxu0 %v173
    %210 = vmatprep.subr.mxu0 0.0
    %211 = vmatpush1.msra.mxu0 %v174
    %212 = vmatprep.subr.mxu0 0.0
    %213 = vmatpush1.msra.mxu0 0.0
    %214 = vmatprep.subr.mxu0 0.0
    %215 = vmatpush1.msra.mxu0 0.0
    %216 = vmatprep.subr.mxu0 0.0
    %217 = vmatpush1.msra.mxu0 0.0
    %218 = vmatprep.subr.mxu0 0.0
    %219 = vmatpush1.msra.mxu0 0.0
    %220 = vmatprep.subr.mxu0 0.0
    %221 = vmatpush1.msra.mxu0 0.0
    %222 = vmatprep.subr.mxu0 0.0
    %223 = vmatpush1.msra.mxu0 0.0
    %224 = vmatprep.subr.mxu0 0.0
    %225 = vmatpush1.msra.mxu0 0.0
    %226 = vmatprep.subr.mxu0 0.0
    %227 = vmatpush1.msra.mxu0 0.0
    %228 = vmatprep.subr.mxu0 0.0
    %229 = vmatpush1.msra.mxu0 0.0
    %230 = vmatprep.subr.mxu0 0.0
    %231 = vmatpush1.msra.mxu0 0.0
    %232 = vmatprep.subr.mxu0 0.0
    %233 = vmatpush1.msra.mxu0 0.0
    %234 = vmatprep.subr.mxu0 0.0
    %235 = vmatpush1.msra.mxu0 0.0
    %236 = vmatprep.subr.mxu0 0.0
    %237 = vmatpush1.msra.mxu0 0.0
    %238 = vmatprep.subr.mxu0 0.0
    %239 = vmatpush1.msra.mxu0 0.0
    %240 = vmatprep.subr.mxu0 0.0
    %241 = vmatpush1.msra.mxu0 0.0
    %242 = vmatprep.subr.mxu0 0.0
    %243 = vmatpush1.msra.mxu0 0.0
    %244 = vmatprep.mubr.f32.mxu0 0.0
    %245 = vmatmul.mubr.f32.gmra.mrb[0].mxu0 %v158
    %v246 = vpop.f32.mrb[0].mxu0
    %v247 = vadd.f32 %v179, %v246
    %v248 = vpop.f32.mrb[0].mxu0
    %249 = vdwg.mxu0
    %v250 = vmax.f32 %v247, 0.0
    %v251 = vld [vmem:[#allocation8] sm:$0xff]
    %v252 = vld [vmem:[#allocation8 + $0x8] sm:$0xff]
    %v253 = vld [vmem:[#allocation8 + $0x10] sm:$0xff]
    %v254 = vld [vmem:[#allocation8 + $0x18] sm:$0xff]
    %v255 = vld [vmem:[#allocation8 + $0x20] sm:$0xff]
    %v256 = vld [vmem:[#allocation8 + $0x28] sm:$0xff]
    %v257 = vld [vmem:[#allocation8 + $0x30] sm:$0xff]
    %v258 = vld [vmem:[#allocation8 + $0x38] sm:$0xff]
    %v259 = vld [vmem:[#allocation8 + $0x40] sm:$0xff]
    %v260 = vld [vmem:[#allocation8 + $0x48] sm:$0xff]
    %v261 = vld [vmem:[#allocation8 + $0x50] sm:$0xff]
    %v262 = vld [vmem:[#allocation8 + $0x58] sm:$0xff]
    %v263 = vld [vmem:[#allocation8 + $0x60] sm:$0xff]
    %v264 = vld [vmem:[#allocation8 + $0x68] sm:$0xff]
    %v265 = vld [vmem:[#allocation8 + $0x70] sm:$0xff]
    %v266 = vld [vmem:[#allocation8 + $0x78] sm:$0xff]
    %v267 = vld [vmem:[%s4 + $0x2] sm:$0x1]
    %v268 = vlaneseq
    %v269 = vshrl.u32 %v268, 7
    %v270 = vsub.s32 0, %v269
    %v271 = vrot.slane %v267, %v270
    %272 = vmatprep.subr.mxu0 0.0
    %273 = vmatpush1.msra.mxu0 %v251
    %274 = vmatprep.subr.mxu0 0.0
    %275 = vmatpush1.msra.mxu0 %v252
    %276 = vmatprep.subr.mxu0 0.0
    %277 = vmatpush1.msra.mxu0 %v253
    %278 = vmatprep.subr.mxu0 0.0
    %279 = vmatpush1.msra.mxu0 %v254
    %280 = vmatprep.subr.mxu0 0.0
    %281 = vmatpush1.msra.mxu0 %v255
    %282 = vmatprep.subr.mxu0 0.0
    %283 = vmatpush1.msra.mxu0 %v256
    %284 = vmatprep.subr.mxu0 0.0
    %285 = vmatpush1.msra.mxu0 %v257
    %286 = vmatprep.subr.mxu0 0.0
    %287 = vmatpush1.msra.mxu0 %v258
    %288 = vmatprep.subr.mxu0 0.0
    %289 = vmatpush1.msra.mxu0 %v259
    %290 = vmatprep.subr.mxu0 0.0
    %291 = vmatpush1.msra.mxu0 %v260
    %292 = vmatprep.subr.mxu0 0.0
    %293 = vmatpush1.msra.mxu0 %v261
    %294 = vmatprep.subr.mxu0 0.0
    %295 = vmatpush1.msra.mxu0 %v262
    %296 = vmatprep.subr.mxu0 0.0
    %297 = vmatpush1.msra.mxu0 %v263
    %298 = vmatprep.subr.mxu0 0.0
    %299 = vmatpush1.msra.mxu0 %v264
    %300 = vmatprep.subr.mxu0 0.0
    %301 = vmatpush1.msra.mxu0 %v265
    %302 = vmatprep.subr.mxu0 0.0
    %303 = vmatpush1.msra.mxu0 %v266
    %304 = vmatprep.subr.mxu0 0.0
    %305 = vmatpush1.msra.mxu0 0.0
    %306 = vmatprep.subr.mxu0 0.0
    %307 = vmatpush1.msra.mxu0 0.0
    %308 = vmatprep.subr.mxu0 0.0
    %309 = vmatpush1.msra.mxu0 0.0
    %310 = vmatprep.subr.mxu0 0.0
    %311 = vmatpush1.msra.mxu0 0.0
    %312 = vmatprep.subr.mxu0 0.0
    %313 = vmatpush1.msra.mxu0 0.0
    %314 = vmatprep.subr.mxu0 0.0
    %315 = vmatpush1.msra.mxu0 0.0
    %316 = vmatprep.subr.mxu0 0.0
    %317 = vmatpush1.msra.mxu0 0.0
    %318 = vmatprep.subr.mxu0 0.0
    %319 = vmatpush1.msra.mxu0 0.0
    %320 = vmatprep.subr.mxu0 0.0
    %321 = vmatpush1.msra.mxu0 0.0
    %322 = vmatprep.subr.mxu0 0.0
    %323 = vmatpush1.msra.mxu0 0.0
    %324 = vmatprep.subr.mxu0 0.0
    %325 = vmatpush1.msra.mxu0 0.0
    %326 = vmatprep.subr.mxu0 0.0
    %327 = vmatpush1.msra.mxu0 0.0
    %328 = vmatprep.subr.mxu0 0.0
    %329 = vmatpush1.msra.mxu0 0.0
    %330 = vmatprep.subr.mxu0 0.0
    %331 = vmatpush1.msra.mxu0 0.0
    %332 = vmatprep.subr.mxu0 0.0
    %333 = vmatpush1.msra.mxu0 0.0
    %334 = vmatprep.subr.mxu0 0.0
    %335 = vmatpush1.msra.mxu0 0.0
    %336 = vmatprep.mubr.f32.mxu0 0.0
    %337 = vmatmul.mubr.f32.gmra.mrb[0].mxu0 %v250
    %v338 = vpop.f32.mrb[0].mxu0
    %v339 = vadd.f32 %v271, %v338
    %v340 = vpop.f32.mrb[0].mxu0
    %341 = vdwg.mxu0
    %342 = vst [vmem:[#allocation10] sm:$0xff] %v339
    // Predicated region
    $region38: #{tpu_custom_call.1} parent=1 // pred_check
      _
    $region39: #{tpu_custom_call.1} parent=1 // pred_check_branch
      %344 = sbr.rel (0) target = $region41
    $region40: #{tpu_custom_call.1} parent=1 // pred_region
      %s346 = ssub.s32 128, 128
      %347 = vsyncadd [#allocation4], %s346
      %s349 = sshll.u32 [#allocation10], 4
      %s350 = int_to_ptr.vmem [resolvable:$true] %s349
      %352 = dma.vmem_to_hbm [thread:$0]  %s350, 128, %s5, [#allocation4]
    $region41: #{tpu_custom_call.1} parent=1 // pred_fallthru
      _
    // Predicated region
    $region42: #{tpu_custom_call.1} parent=1 // pred_check
      _
    $region43: #{tpu_custom_call.1} parent=1 // pred_check_branch
      %354 = sbr.rel (0) target = $region45
    $region44: #{tpu_custom_call.1} parent=1 // pred_region
      %355 = dma.done [#allocation4], 128
    $region45: #{tpu_custom_call.1} parent=1 // pred_fallthru
      _
    %356 = vsyncpa [#allocation3], 1
    %357 = vsyncpa [#allocation6], 1
    %358 = vsyncpa [#allocation9], 1
    %359 = vsyncpa [#allocation4], 1

</llo_original>
